<compile_context>
chip_gen: v5e
topology: v5e:2x2
jax: 0.10.0
libtpu: 0.0.40
codegen_flags: <defaults>
</compile_context>

<pallas_src>
import math
import functools

import jax
import jax.numpy as jnp
from jax.experimental import pallas as pl
from jax.experimental.pallas import tpu as pltpu


def make_fixed_embedding(input_dim: int, embed_dim: int) -> jnp.ndarray:
    """Replicates FixedEmbedding.__init__ weight construction (sin/cos table)."""
    position = jnp.arange(0, input_dim, dtype=jnp.float32)[:, None]            # (V, 1)
    div_term = jnp.exp(
        jnp.arange(0, embed_dim, 2, dtype=jnp.float32)
        * -(math.log(10000.0) / embed_dim))                                    # (ceil(D/2),)
    ang = position * div_term                                                   # (V, ceil(D/2))
    w = jnp.zeros((input_dim, embed_dim), dtype=jnp.float32)
    n_sin = (embed_dim + 1) // 2
    n_cos = embed_dim // 2
    w = w.at[:, 0::2].set(jnp.sin(ang[:, :n_sin]))
    w = w.at[:, 1::2].set(jnp.cos(ang[:, :n_cos]))
    return w


def _round_up(x: int, m: int) -> int:
    return ((x + m - 1) // m) * m


def _build_combined_table(tables, embed_dim: int, pack: int):
    """Concat tables along vocab, pad to Vp, tile `pack` copies block-diagonally.

    Returns (combined [pack*Vp, pack*D] f32, Vp). Pack slot j reads rows
    [j*Vp, (j+1)*Vp) and writes columns [j*D, (j+1)*D), so one matmul emits a
    lane-dense (rows, pack*D) block covering `pack` consecutive tokens.
    """
    base = jnp.concatenate(tables, axis=0)                       # (V_total, D)
    v_total = base.shape[0]
    k_align = (128 // pack) if pack > 1 else 8                   # K = pack*Vp multiple of 128
    vp = _round_up(v_total, max(8, k_align))
    base_p = jnp.pad(base, ((0, vp - v_total), (0, 0)))          # (Vp, D)
    combined = jnp.zeros((pack * vp, pack * embed_dim), dtype=jnp.float32)
    for j in range(pack):
        combined = combined.at[j * vp:(j + 1) * vp,
                               j * embed_dim:(j + 1) * embed_dim].set(base_p)
    return combined, vp


def temporal_embed_kernel(idx_ref, hi_ref, lo_ref, out_ref):
    # idx_ref: (tile4, pack*3) int32 — field-offset indices (NO pack-block offsets).
    # hi_ref/lo_ref: (K, L) bf16 hi/lo halves of the block-diagonal table
    #                (K = pack*Vp, L = pack*D).
    # out_ref: (tile4, L) float32, lane-dense (L = 128 for D = 32).
    ids = idx_ref[...]                                            # (tile4, pack*3)
    rows, n_idx = ids.shape
    k = hi_ref.shape[0]
    pack = n_idx // 3
    vp = k // pack

    # Per pack slot: OR-accumulate 3 compares against a Vp-lane iota (no zeros
    # init, no f32 adds); the 3 field indices of a token hit disjoint vocab
    # ranges so OR == exact multi-hot. Sub-blocks are cast to bf16 (exact 0/1)
    # and concatenated along lanes into the K-lane selector.
    iota = jax.lax.broadcasted_iota(jnp.int32, (rows, vp), 1)
    subs = []
    for j in range(pack):
        hit = ids[:, 3 * j:3 * j + 1] == iota
        hit = hit | (ids[:, 3 * j + 1:3 * j + 2] == iota)
        hit = hit | (ids[:, 3 * j + 2:3 * j + 3] == iota)
        subs.append(hit.astype(jnp.bfloat16))
    mh = subs[0] if pack == 1 else jnp.concatenate(subs, axis=-1)  # (tile4, K)

    # bf16 hi/lo table split: two single-pass MXU matmuls accumulated in f32
    # instead of a multi-pass f32 dot. Error bound ~3 * 2^-18 per output elem.
    acc = jnp.dot(mh, hi_ref[...], preferred_element_type=jnp.float32)
    acc = acc + jnp.dot(mh, lo_ref[...], preferred_element_type=jnp.float32)
    out_ref[...] = acc


@functools.partial(jax.jit, static_argnames=("tile_rows",))
def temporal_embedding(x, wk_tab, day_tab, mon_tab, *, tile_rows=8192):
    """x: [B, T, 3] int (weekday, day, month); returns [B, T, D] float32."""
    B, T, _ = x.shape
    D = wk_tab.shape[1]
    N = B * T

    # Pack `pack` consecutive tokens per output row so lane width = pack*D >= 128.
    pack = (128 // D) if (D <= 128 and 128 % D == 0) else 1
    L = pack * D

    sizes = (wk_tab.shape[0], day_tab.shape[0], mon_tab.shape[0])
    combined, _ = _build_combined_table((wk_tab, day_tab, mon_tab), D, pack)
    tab_hi = combined.astype(jnp.bfloat16)
    tab_lo = (combined - tab_hi.astype(jnp.float32)).astype(jnp.bfloat16)

    # Fold field offsets only; the pack-block selection happens in-kernel.
    field_off = jnp.array([0, sizes[0], sizes[0] + sizes[1]], dtype=jnp.int32)
    idx = x.reshape(N, 3).astype(jnp.int32) + field_off[None, :]  # (N, 3)
    # NOTE: out-of-range/negative indices silently contribute zero (multi-hot
    # matches nothing); inputs are assumed validated upstream, as in PyTorch.

    # Packed-row count and tiling. Cap the tile so the grid keeps >= 2 steps
    # (v7x has 2 TensorCores); pad N up instead of asserting divisibility.
    n4 = pl.cdiv(N, pack)
    want = _round_up(max(1, tile_rows // pack), 8)
    half = _round_up(pl.cdiv(n4, 2), 8)
    tile4 = max(8, min(want, half))
    n4_pad = _round_up(n4, tile4)
    n_pad = n4_pad * pack
    idx = jnp.pad(idx, ((0, n_pad - N), (0, 0)))                  # pad rows -> index 0 (valid)
    idx_flat = idx.reshape(n4_pad, pack * 3)

    out_packed = pl.pallas_call(
        temporal_embed_kernel,
        out_shape=jax.ShapeDtypeStruct((n4_pad, L), jnp.float32),
        grid_spec=pltpu.PrefetchScalarGridSpec(
            num_scalar_prefetch=0,
            grid=(n4_pad // tile4,),
            in_specs=[
                pl.BlockSpec((tile4, pack * 3), lambda i: (i, 0)),  # packed indices
                pl.BlockSpec(tab_hi.shape, lambda i: (0, 0)),       # bf16 hi table (resident)
                pl.BlockSpec(tab_lo.shape, lambda i: (0, 0)),       # bf16 lo table (resident)
            ],
            out_specs=pl.BlockSpec((tile4, L), lambda i: (i, 0)),   # lane-dense output
        ),
        compiler_params=pltpu.CompilerParams(
            dimension_semantics=("parallel",),                      # megacore shard on v7x
            vmem_limit_bytes=32 * 1024 * 1024),
    )(idx_flat, tab_hi, tab_lo)

    # One XLA relayout pass (packed 128-lane -> token-major 32-lane). Consumers
    # that can accept the packed (N/pack, pack*D) layout should use out_packed.
    out = out_packed.reshape(n_pad, D)[:N]
    return out.reshape(B, T, D)


if __name__ == "__main__":
    embed_dim = 32
    weekday_size, day_size, month_size = 7, 32, 13

    # Deterministic fixed (non-learned) sinusoidal tables.
    wk_tab = make_fixed_embedding(weekday_size, embed_dim)
    day_tab = make_fixed_embedding(day_size, embed_dim)
    mon_tab = make_fixed_embedding(month_size, embed_dim)

    def ref_fn(x):  # pure-JAX reference: plain gathers + sum (== PyTorch forward)
        return wk_tab[x[..., 0]] + day_tab[x[..., 1]] + mon_tab[x[..., 2]]

    key = jax.random.PRNGKey(0)
    k1, k2, k3, k4, k5, k6 = jax.random.split(key, 6)

    # Small primary check: B=2, T=8, features = (weekday, day, month) indices.
    B, T = 2, 8
    x = jnp.stack([
        jax.random.randint(k1, (B, T), 0, weekday_size),
        jax.random.randint(k2, (B, T), 0, day_size),
        jax.random.randint(k3, (B, T), 0, month_size)], axis=-1).astype(jnp.int32)
    out = jax.block_until_ready(temporal_embedding(x, wk_tab, day_tab, mon_tab))
    assert out.shape == (B, T, embed_dim)
    # bf16 hi/lo split bounds per-element abs error at ~3 * 2^-18 ~= 1.2e-5.
    assert jnp.allclose(out, ref_fn(x), atol=2e-5, rtol=1e-5)

    # Ragged second check: exercises N % pack != 0, row padding, and grid > 1.
    B2, T2 = 3, 37
    x2 = jnp.stack([
        jax.random.randint(k4, (B2, T2), 0, weekday_size),
        jax.random.randint(k5, (B2, T2), 0, day_size),
        jax.random.randint(k6, (B2, T2), 0, month_size)], axis=-1).astype(jnp.int32)
    out2 = jax.block_until_ready(temporal_embedding(x2, wk_tab, day_tab, mon_tab))
    assert out2.shape == (B2, T2, embed_dim)
    assert jnp.allclose(out2, ref_fn(x2), atol=2e-5, rtol=1e-5)

    print("KERNEL_OK")
</pallas_src>

<mosaic_0001>
module attributes {stable_mosaic.version = 11 : i64} {
  func.func @temporal_embed_kernel(%arg0: i32, %arg1: memref<8x12xi32, #tpu.memory_space<vmem>>, %arg2: memref<256x128xbf16, #tpu.memory_space<vmem>>, %arg3: memref<256x128xbf16, #tpu.memory_space<vmem>>, %arg4: memref<8x128xf32, #tpu.memory_space<vmem>>) attributes {dimension_semantics = [#tpu.dimension_semantics<parallel>], iteration_bounds = array<i64: 1>, scalar_prefetch = 0 : i64, scratch_operands = 0 : i64, tpu.core_type = #tpu.core_type<tc>, window_params = [{transform_indices = @transform_0, window_bounds = array<i64: 8, 12>}, {pipeline_mode = #tpu.pipeline_mode<synchronous>, transform_indices = @transform_1, window_bounds = array<i64: 256, 128>}, {pipeline_mode = #tpu.pipeline_mode<synchronous>, transform_indices = @transform_2, window_bounds = array<i64: 256, 128>}, {transform_indices = @transform_3, window_bounds = array<i64: 8, 128>}]} {
    %c0 = arith.constant 0 : index
    %c0_0 = arith.constant 0 : index
    %0 = vector.load %arg1[%c0, %c0_0] : memref<8x12xi32, #tpu.memory_space<vmem>>, vector<8x12xi32>
    %1 = tpu.iota {dimensions = array<i32: 1>} : vector<8x64xi32>
    %2 = vector.extract_strided_slice %0 {offsets = [0, 0], sizes = [8, 1], strides = [1, 1]} : vector<8x12xi32> to vector<8x1xi32>
    %3 = vector.broadcast %2 : vector<8x1xi32> to vector<8x64xi32>
    %4 = arith.cmpi eq, %3, %1 : vector<8x64xi32>
    %5 = vector.extract_strided_slice %0 {offsets = [0, 1], sizes = [8, 1], strides = [1, 1]} : vector<8x12xi32> to vector<8x1xi32>
    %6 = vector.broadcast %5 : vector<8x1xi32> to vector<8x64xi32>
    %7 = arith.cmpi eq, %6, %1 : vector<8x64xi32>
    %8 = arith.ori %4, %7 : vector<8x64xi1>
    %9 = vector.extract_strided_slice %0 {offsets = [0, 2], sizes = [8, 1], strides = [1, 1]} : vector<8x12xi32> to vector<8x1xi32>
    %10 = vector.broadcast %9 : vector<8x1xi32> to vector<8x64xi32>
    %11 = arith.cmpi eq, %10, %1 : vector<8x64xi32>
    %12 = arith.ori %8, %11 : vector<8x64xi1>
    %13 = arith.extui %12 : vector<8x64xi1> to vector<8x64xi32>
    %14 = arith.sitofp %13 : vector<8x64xi32> to vector<8x64xf32>
    %15 = arith.truncf %14 : vector<8x64xf32> to vector<8x64xbf16>
    %16 = vector.extract_strided_slice %0 {offsets = [0, 3], sizes = [8, 1], strides = [1, 1]} : vector<8x12xi32> to vector<8x1xi32>
    %17 = vector.broadcast %16 : vector<8x1xi32> to vector<8x64xi32>
    %18 = arith.cmpi eq, %17, %1 : vector<8x64xi32>
    %19 = vector.extract_strided_slice %0 {offsets = [0, 4], sizes = [8, 1], strides = [1, 1]} : vector<8x12xi32> to vector<8x1xi32>
    %20 = vector.broadcast %19 : vector<8x1xi32> to vector<8x64xi32>
    %21 = arith.cmpi eq, %20, %1 : vector<8x64xi32>
    %22 = arith.ori %18, %21 : vector<8x64xi1>
    %23 = vector.extract_strided_slice %0 {offsets = [0, 5], sizes = [8, 1], strides = [1, 1]} : vector<8x12xi32> to vector<8x1xi32>
    %24 = vector.broadcast %23 : vector<8x1xi32> to vector<8x64xi32>
    %25 = arith.cmpi eq, %24, %1 : vector<8x64xi32>
    %26 = arith.ori %22, %25 : vector<8x64xi1>
    %27 = arith.extui %26 : vector<8x64xi1> to vector<8x64xi32>
    %28 = arith.sitofp %27 : vector<8x64xi32> to vector<8x64xf32>
    %29 = arith.truncf %28 : vector<8x64xf32> to vector<8x64xbf16>
    %30 = vector.extract_strided_slice %0 {offsets = [0, 6], sizes = [8, 1], strides = [1, 1]} : vector<8x12xi32> to vector<8x1xi32>
    %31 = vector.broadcast %30 : vector<8x1xi32> to vector<8x64xi32>
    %32 = arith.cmpi eq, %31, %1 : vector<8x64xi32>
    %33 = vector.extract_strided_slice %0 {offsets = [0, 7], sizes = [8, 1], strides = [1, 1]} : vector<8x12xi32> to vector<8x1xi32>
    %34 = vector.broadcast %33 : vector<8x1xi32> to vector<8x64xi32>
    %35 = arith.cmpi eq, %34, %1 : vector<8x64xi32>
    %36 = arith.ori %32, %35 : vector<8x64xi1>
    %37 = vector.extract_strided_slice %0 {offsets = [0, 8], sizes = [8, 1], strides = [1, 1]} : vector<8x12xi32> to vector<8x1xi32>
    %38 = vector.broadcast %37 : vector<8x1xi32> to vector<8x64xi32>
    %39 = arith.cmpi eq, %38, %1 : vector<8x64xi32>
    %40 = arith.ori %36, %39 : vector<8x64xi1>
    %41 = arith.extui %40 : vector<8x64xi1> to vector<8x64xi32>
    %42 = arith.sitofp %41 : vector<8x64xi32> to vector<8x64xf32>
    %43 = arith.truncf %42 : vector<8x64xf32> to vector<8x64xbf16>
    %44 = vector.extract_strided_slice %0 {offsets = [0, 9], sizes = [8, 1], strides = [1, 1]} : vector<8x12xi32> to vector<8x1xi32>
    %45 = vector.broadcast %44 : vector<8x1xi32> to vector<8x64xi32>
    %46 = arith.cmpi eq, %45, %1 : vector<8x64xi32>
    %47 = vector.extract_strided_slice %0 {offsets = [0, 10], sizes = [8, 1], strides = [1, 1]} : vector<8x12xi32> to vector<8x1xi32>
    %48 = vector.broadcast %47 : vector<8x1xi32> to vector<8x64xi32>
    %49 = arith.cmpi eq, %48, %1 : vector<8x64xi32>
    %50 = arith.ori %46, %49 : vector<8x64xi1>
    %51 = vector.extract_strided_slice %0 {offsets = [0, 11], sizes = [8, 1], strides = [1, 1]} : vector<8x12xi32> to vector<8x1xi32>
    %52 = vector.broadcast %51 : vector<8x1xi32> to vector<8x64xi32>
    %53 = arith.cmpi eq, %52, %1 : vector<8x64xi32>
    %54 = arith.ori %50, %53 : vector<8x64xi1>
    %55 = arith.extui %54 : vector<8x64xi1> to vector<8x64xi32>
    %56 = arith.sitofp %55 : vector<8x64xi32> to vector<8x64xf32>
    %57 = arith.truncf %56 : vector<8x64xf32> to vector<8x64xbf16>
    %58 = tpu.concatenate %15, %29, %43, %57 in 1 : vector<8x64xbf16>, vector<8x64xbf16>, vector<8x64xbf16>, vector<8x64xbf16> -> vector<8x256xbf16>
    %c0_1 = arith.constant 0 : index
    %c0_2 = arith.constant 0 : index
    %59 = vector.load %arg2[%c0_1, %c0_2] : memref<256x128xbf16, #tpu.memory_space<vmem>>, vector<256x128xbf16>
    %cst = arith.constant dense<0.000000e+00> : vector<8x128xf32>
    %60 = tpu.matmul %58, %59, %cst {dimension_numbers = #tpu.dot_dimension_numbers<[1], [0], [0], [1], [0, 0, 1, 1], [], []>} : vector<8x256xbf16>, vector<256x128xbf16>, vector<8x128xf32> -> vector<8x128xf32>
    %c0_3 = arith.constant 0 : index
    %c0_4 = arith.constant 0 : index
    %61 = vector.load %arg3[%c0_3, %c0_4] : memref<256x128xbf16, #tpu.memory_space<vmem>>, vector<256x128xbf16>
    %cst_5 = arith.constant dense<0.000000e+00> : vector<8x128xf32>
    %62 = tpu.matmul %58, %61, %cst_5 {dimension_numbers = #tpu.dot_dimension_numbers<[1], [0], [0], [1], [0, 0, 1, 1], [], []>} : vector<8x256xbf16>, vector<256x128xbf16>, vector<8x128xf32> -> vector<8x128xf32>
    %63 = arith.addf %60, %62 : vector<8x128xf32>
    %c0_6 = arith.constant 0 : index
    %c0_7 = arith.constant 0 : index
    %64 = vector.load %arg4[%c0_6, %c0_7] : memref<8x128xf32, #tpu.memory_space<vmem>>, vector<8x128xf32>
    tpu.vector_store %arg4[%c0_6, %c0_7], %63 {strides = array<i32>} : memref<8x128xf32, #tpu.memory_space<vmem>>, vector<8x128xf32>,
    return
  }
  func.func @transform_0(%arg0: i32) -> (i32, i32) {
    %c0_i32 = arith.constant 0 : i32
    %c0_i32_0 = arith.constant 0 : i32
    return %arg0, %c0_i32 : i32, i32
  }
  func.func @transform_1(%arg0: i32) -> (i32, i32) {
    %c0_i32 = arith.constant 0 : i32
    %c0_i32_0 = arith.constant 0 : i32
    %c0_i32_1 = arith.constant 0 : i32
    return %c0_i32, %c0_i32_0 : i32, i32
  }
  func.func @transform_2(%arg0: i32) -> (i32, i32) {
    %c0_i32 = arith.constant 0 : i32
    %c0_i32_0 = arith.constant 0 : i32
    %c0_i32_1 = arith.constant 0 : i32
    return %c0_i32, %c0_i32_0 : i32, i32
  }
  func.func @transform_3(%arg0: i32) -> (i32, i32) {
    %c0_i32 = arith.constant 0 : i32
    %c0_i32_0 = arith.constant 0 : i32
    return %arg0, %c0_i32 : i32, i32
  }
}

</mosaic_0001>

<llo_original>
// kernel: temporal_embedding.1
$region0: #{temporal_embedding.1}
  #allocation0 [shape = 'u32[]', space=smem, size = 0x4, offset = 0x4, fixed_abs, tag = 'smem constant byte address 0x4 - core index']
  #allocation1 [shape = 'u32[72,128]{1,0:T(1,128)}', space=vmem, size = 0x9000, scoped, tag = 'internal scratch']
  %s0 = inlined_call_operand.vmem [shape: s32[8,12], index: 0, kind: input, shape index: {}]
  %s1 = inlined_call_operand.vmem [shape: bf16[256,128], index: 1, kind: input, shape index: {}]
  %s2 = inlined_call_operand.vmem [shape: bf16[256,128], index: 2, kind: input, shape index: {}]
  %s3 = inlined_call_operand.vmem [shape: f32[8,128], index: 3, kind: output, shape index: {}]
  %s4 = sld [smem:[#allocation0]]
  $region22: #{temporal_embedding.1} parent=0
    _
  %s6 = ssub.s32 1, %s4
  %s7 = scalar_select 0, %s6, %s4
  // Predicated region
  $region2: #{temporal_embedding.1} parent=0 // pred_check
    _
  $region3: #{temporal_embedding.1} parent=0 // pred_check_branch
    %9 = sbr.rel (0) target = $region5
  $region4: #{temporal_embedding.1} parent=0 // pred_region
    _
  $region5: #{temporal_embedding.1} parent=0 // pred_fallthru
    _
  // Predicated region
  $region6: #{temporal_embedding.1} parent=0 // pred_check
    _
  $region7: #{temporal_embedding.1} parent=0 // pred_check_branch
    %11 = sbr.rel (0) target = $region9
  $region8: #{temporal_embedding.1} parent=0 // pred_region
    _
  $region9: #{temporal_embedding.1} parent=0 // pred_fallthru
    _
  // Predicated region
  $region10: #{temporal_embedding.1} parent=0 // pred_check
    _
  $region11: #{temporal_embedding.1} parent=0 // pred_check_branch
    %13 = sbr.rel (0) target = $region13
  $region12: #{temporal_embedding.1} parent=0 // pred_region
    _
  $region13: #{temporal_embedding.1} parent=0 // pred_fallthru
    _
  %v14 = vld [vmem:[%s0] sm:$0xff]
  %v15 = vlaneseq
  %v16 = vand.u32 %v15, 127
  %17 = vset.pattern.permute.xlu0 0
  %18 = vperm.xlu0 %17, %v14
  %v19 = vpop.permute.xlu0 %18
  %vm20 = vcmp.eq.s32.totalorder %v19, %v16
  %21 = vset.pattern.permute.xlu0 1
  %22 = vperm.xlu0 %21, %v14
  %v23 = vpop.permute.xlu0 %22
  %vm24 = vcmp.eq.s32.totalorder %v23, %v16
  %vm25 = vmor %vm20, %vm24
  %26 = vset.pattern.permute.xlu0 2
  %27 = vperm.xlu0 %26, %v14
  %v28 = vpop.permute.xlu0 %27
  %vm29 = vcmp.eq.s32.totalorder %v28, %v16
  %vm30 = vmor %vm25, %vm29
  %v31 = vsel %vm30, 1, 0
  %v32 = vcvt.s32.f32 %v31
  %v33 = vpack.c.bf16 %v32, %v32
  %34 = vset.pattern.permute.xlu0 3
  %35 = vperm.xlu0 %34, %v14
  %v36 = vpop.permute.xlu0 %35
  %vm37 = vcmp.eq.s32.totalorder %v36, %v16
  %38 = vset.pattern.permute.xlu0 4
  %39 = vperm.xlu0 %38, %v14
  %v40 = vpop.permute.xlu0 %39
  %vm41 = vcmp.eq.s32.totalorder %v40, %v16
  %vm42 = vmor %vm37, %vm41
  %43 = vset.pattern.permute.xlu0 5
  %44 = vperm.xlu0 %43, %v14
  %v45 = vpop.permute.xlu0 %44
  %vm46 = vcmp.eq.s32.totalorder %v45, %v16
  %vm47 = vmor %vm42, %vm46
  %v48 = vsel %vm47, 1, 0
  %v49 = vcvt.s32.f32 %v48
  %v50 = vpack.c.bf16 %v49, %v49
  %51 = vset.pattern.permute.xlu0 6
  %52 = vperm.xlu0 %51, %v14
  %v53 = vpop.permute.xlu0 %52
  %vm54 = vcmp.eq.s32.totalorder %v53, %v16
  %55 = vset.pattern.permute.xlu0 7
  %56 = vperm.xlu0 %55, %v14
  %v57 = vpop.permute.xlu0 %56
  %vm58 = vcmp.eq.s32.totalorder %v57, %v16
  %vm59 = vmor %vm54, %vm58
  %60 = vset.pattern.permute.xlu0 8
  %61 = vperm.xlu0 %60, %v14
  %v62 = vpop.permute.xlu0 %61
  %vm63 = vcmp.eq.s32.totalorder %v62, %v16
  %vm64 = vmor %vm59, %vm63
  %v65 = vsel %vm64, 1, 0
  %v66 = vcvt.s32.f32 %v65
  %v67 = vpack.c.bf16 %v66, %v66
  %68 = vset.pattern.permute.xlu0 9
  %69 = vperm.xlu0 %68, %v14
  %v70 = vpop.permute.xlu0 %69
  %vm71 = vcmp.eq.s32.totalorder %v70, %v16
  %72 = vset.pattern.permute.xlu0 10
  %73 = vperm.xlu0 %72, %v14
  %v74 = vpop.permute.xlu0 %73
  %vm75 = vcmp.eq.s32.totalorder %v74, %v16
  %vm76 = vmor %vm71, %vm75
  %77 = vset.pattern.permute.xlu0 11
  %78 = vperm.xlu0 %77, %v14
  %v79 = vpop.permute.xlu0 %78
  %vm80 = vcmp.eq.s32.totalorder %v79, %v16
  %vm81 = vmor %vm76, %vm80
  %v82 = vsel %vm81, 1, 0
  %v83 = vcvt.s32.f32 %v82
  %v84 = vpack.c.bf16 %v83, %v83
  %v86 = vunpack.c.l.b16 %v50
  %v87 = vpack.c.b16 %v86, %v86
  %88 = vrot.lane.b32.xlu0 %v87, 64
  %v89 = vpop.permute.xlu0 %88
  %v91 = vunpack.c.l.b16 %v84
  %v92 = vpack.c.b16 %v91, %v91
  %93 = vrot.lane.b32.xlu0 %v92, 64
  %v94 = vpop.permute.xlu0 %93
  %vm95 = vcmask 523264
  %v98 = vsel %vm95, %v33, %v89
  %v102 = vsel %vm95, %v67, %v94
  %v104 = vld [vmem:[%s1] sm:$0xf]
  %v105 = vld [vmem:[%s1 + $0x4] sm:$0xf]
  %v106 = vld [vmem:[%s1 + $0x8] sm:$0xf]
  %v107 = vld [vmem:[%s1 + $0xc] sm:$0xf]
  %v108 = vld [vmem:[%s1 + $0x10] sm:$0xf]
  %v109 = vld [vmem:[%s1 + $0x14] sm:$0xf]
  %v110 = vld [vmem:[%s1 + $0x18] sm:$0xf]
  %v111 = vld [vmem:[%s1 + $0x1c] sm:$0xf]
  %v112 = vld [vmem:[%s1 + $0x20] sm:$0xf]
  %v113 = vld [vmem:[%s1 + $0x24] sm:$0xf]
  %v114 = vld [vmem:[%s1 + $0x28] sm:$0xf]
  %v115 = vld [vmem:[%s1 + $0x2c] sm:$0xf]
  %v116 = vld [vmem:[%s1 + $0x30] sm:$0xf]
  %v117 = vld [vmem:[%s1 + $0x34] sm:$0xf]
  %v118 = vld [vmem:[%s1 + $0x38] sm:$0xf]
  %v119 = vld [vmem:[%s1 + $0x3c] sm:$0xf]
  %v120 = vld [vmem:[%s1 + $0x40] sm:$0xf]
  %v121 = vld [vmem:[%s1 + $0x44] sm:$0xf]
  %v122 = vld [vmem:[%s1 + $0x48] sm:$0xf]
  %v123 = vld [vmem:[%s1 + $0x4c] sm:$0xf]
  %v124 = vld [vmem:[%s1 + $0x50] sm:$0xf]
  %v125 = vld [vmem:[%s1 + $0x54] sm:$0xf]
  %v126 = vld [vmem:[%s1 + $0x58] sm:$0xf]
  %v127 = vld [vmem:[%s1 + $0x5c] sm:$0xf]
  %v128 = vld [vmem:[%s1 + $0x60] sm:$0xf]
  %v129 = vld [vmem:[%s1 + $0x64] sm:$0xf]
  %v130 = vld [vmem:[%s1 + $0x68] sm:$0xf]
  %v131 = vld [vmem:[%s1 + $0x6c] sm:$0xf]
  %v132 = vld [vmem:[%s1 + $0x70] sm:$0xf]
  %v133 = vld [vmem:[%s1 + $0x74] sm:$0xf]
  %v134 = vld [vmem:[%s1 + $0x78] sm:$0xf]
  %v135 = vld [vmem:[%s1 + $0x7c] sm:$0xf]
  %v136 = vld [vmem:[%s2] sm:$0xf]
  %v137 = vld [vmem:[%s2 + $0x4] sm:$0xf]
  %v138 = vld [vmem:[%s2 + $0x8] sm:$0xf]
  %v139 = vld [vmem:[%s2 + $0xc] sm:$0xf]
  %v140 = vld [vmem:[%s2 + $0x10] sm:$0xf]
  %v141 = vld [vmem:[%s2 + $0x14] sm:$0xf]
  %v142 = vld [vmem:[%s2 + $0x18] sm:$0xf]
  %v143 = vld [vmem:[%s2 + $0x1c] sm:$0xf]
  %v144 = vld [vmem:[%s2 + $0x20] sm:$0xf]
  %v145 = vld [vmem:[%s2 + $0x24] sm:$0xf]
  %v146 = vld [vmem:[%s2 + $0x28] sm:$0xf]
  %v147 = vld [vmem:[%s2 + $0x2c] sm:$0xf]
  %v148 = vld [vmem:[%s2 + $0x30] sm:$0xf]
  %v149 = vld [vmem:[%s2 + $0x34] sm:$0xf]
  %v150 = vld [vmem:[%s2 + $0x38] sm:$0xf]
  %v151 = vld [vmem:[%s2 + $0x3c] sm:$0xf]
  %v152 = vld [vmem:[%s2 + $0x40] sm:$0xf]
  %v153 = vld [vmem:[%s2 + $0x44] sm:$0xf]
  %v154 = vld [vmem:[%s2 + $0x48] sm:$0xf]
  %v155 = vld [vmem:[%s2 + $0x4c] sm:$0xf]
  %v156 = vld [vmem:[%s2 + $0x50] sm:$0xf]
  %v157 = vld [vmem:[%s2 + $0x54] sm:$0xf]
  %v158 = vld [vmem:[%s2 + $0x58] sm:$0xf]
  %v159 = vld [vmem:[%s2 + $0x5c] sm:$0xf]
  %v160 = vld [vmem:[%s2 + $0x60] sm:$0xf]
  %v161 = vld [vmem:[%s2 + $0x64] sm:$0xf]
  %v162 = vld [vmem:[%s2 + $0x68] sm:$0xf]
  %v163 = vld [vmem:[%s2 + $0x6c] sm:$0xf]
  %v164 = vld [vmem:[%s2 + $0x70] sm:$0xf]
  %v165 = vld [vmem:[%s2 + $0x74] sm:$0xf]
  %v166 = vld [vmem:[%s2 + $0x78] sm:$0xf]
  %v167 = vld [vmem:[%s2 + $0x7c] sm:$0xf]
  %v200 = vunpack.c.l.b16 %v136
  %v201 = vunpack.c.l.b16 %v137
  %v202 = vunpack.c.l.b16 %v138
  %v203 = vunpack.c.l.b16 %v139
  %v204 = vunpack.c.l.b16 %v140
  %v205 = vunpack.c.l.b16 %v141
  %v206 = vunpack.c.l.b16 %v142
  %v207 = vunpack.c.l.b16 %v143
  %v208 = vunpack.c.l.b16 %v144
  %v209 = vunpack.c.l.b16 %v145
  %v210 = vunpack.c.l.b16 %v146
  %v211 = vunpack.c.l.b16 %v147
  %v212 = vunpack.c.l.b16 %v148
  %v213 = vunpack.c.l.b16 %v149
  %v214 = vunpack.c.l.b16 %v150
  %v215 = vunpack.c.l.b16 %v151
  %v216 = vunpack.c.l.b16 %v152
  %v217 = vunpack.c.l.b16 %v153
  %v218 = vunpack.c.l.b16 %v154
  %v219 = vunpack.c.l.b16 %v155
  %v220 = vunpack.c.l.b16 %v156
  %v221 = vunpack.c.l.b16 %v157
  %v222 = vunpack.c.l.b16 %v158
  %v223 = vunpack.c.l.b16 %v159
  %v224 = vunpack.c.l.b16 %v160
  %v225 = vunpack.c.l.b16 %v161
  %v226 = vunpack.c.l.b16 %v162
  %v227 = vunpack.c.l.b16 %v163
  %v228 = vunpack.c.l.b16 %v164
  %v229 = vunpack.c.l.b16 %v165
  %v230 = vunpack.c.l.b16 %v166
  %v231 = vunpack.c.l.b16 %v167
  %v232 = vpack.c.b16 %v201, %v200
  %v233 = vpack.c.b16 %v203, %v202
  %v234 = vpack.c.b16 %v205, %v204
  %v235 = vpack.c.b16 %v207, %v206
  %v236 = vpack.c.b16 %v209, %v208
  %v237 = vpack.c.b16 %v211, %v210
  %v238 = vpack.c.b16 %v213, %v212
  %v239 = vpack.c.b16 %v215, %v214
  %v240 = vpack.c.b16 %v217, %v216
  %v241 = vpack.c.b16 %v219, %v218
  %v242 = vpack.c.b16 %v221, %v220
  %v243 = vpack.c.b16 %v223, %v222
  %v244 = vpack.c.b16 %v225, %v224
  %v245 = vpack.c.b16 %v227, %v226
  %v246 = vpack.c.b16 %v229, %v228
  %v247 = vpack.c.b16 %v231, %v230
  %264 = vmatpush.bf16.msra.mxu0 %v239
  %265 = vmatpush.bf16.msra.mxu0 %v238
  %266 = vmatpush.bf16.msra.mxu0 %v237
  %267 = vmatpush.bf16.msra.mxu0 %v236
  %268 = vmatpush.bf16.msra.mxu0 %v235
  %269 = vmatpush.bf16.msra.mxu0 %v234
  %270 = vmatpush.bf16.msra.mxu0 %v233
  %271 = vmatpush.bf16.msra.mxu0 %v232
  %272 = vmatmul.bf16.gmra.mxu0 %v98
  %v273 = vpop.f32.mrf.mxu0
  %v274 = vadd.f32 0.0, %v273
  %v275 = vpop.f32.mrf.mxu0
  %276 = vdwg.mxu0
  %277 = vmatpush.bf16.msra.mxu0 %v247
  %278 = vmatpush.bf16.msra.mxu0 %v246
  %279 = vmatpush.bf16.msra.mxu0 %v245
  %280 = vmatpush.bf16.msra.mxu0 %v244
  %281 = vmatpush.bf16.msra.mxu0 %v243
  %282 = vmatpush.bf16.msra.mxu0 %v242
  %283 = vmatpush.bf16.msra.mxu0 %v241
  %284 = vmatpush.bf16.msra.mxu0 %v240
  %285 = vmatmul.bf16.gmra.mxu0 %v102
  %v286 = vpop.f32.mrf.mxu0
  %v287 = vadd.f32 %v274, %v286
  %v288 = vpop.f32.mrf.mxu0
  %289 = vdwg.mxu0
  %v322 = vunpack.c.l.b16 %v104
  %v323 = vunpack.c.l.b16 %v105
  %v324 = vunpack.c.l.b16 %v106
  %v325 = vunpack.c.l.b16 %v107
  %v326 = vunpack.c.l.b16 %v108
  %v327 = vunpack.c.l.b16 %v109
  %v328 = vunpack.c.l.b16 %v110
  %v329 = vunpack.c.l.b16 %v111
  %v330 = vunpack.c.l.b16 %v112
  %v331 = vunpack.c.l.b16 %v113
  %v332 = vunpack.c.l.b16 %v114
  %v333 = vunpack.c.l.b16 %v115
  %v334 = vunpack.c.l.b16 %v116
  %v335 = vunpack.c.l.b16 %v117
  %v336 = vunpack.c.l.b16 %v118
  %v337 = vunpack.c.l.b16 %v119
  %v338 = vunpack.c.l.b16 %v120
  %v339 = vunpack.c.l.b16 %v121
  %v340 = vunpack.c.l.b16 %v122
  %v341 = vunpack.c.l.b16 %v123
  %v342 = vunpack.c.l.b16 %v124
  %v343 = vunpack.c.l.b16 %v125
  %v344 = vunpack.c.l.b16 %v126
  %v345 = vunpack.c.l.b16 %v127
  %v346 = vunpack.c.l.b16 %v128
  %v347 = vunpack.c.l.b16 %v129
  %v348 = vunpack.c.l.b16 %v130
  %v349 = vunpack.c.l.b16 %v131
  %v350 = vunpack.c.l.b16 %v132
  %v351 = vunpack.c.l.b16 %v133
  %v352 = vunpack.c.l.b16 %v134
  %v353 = vunpack.c.l.b16 %v135
  %v354 = vpack.c.b16 %v323, %v322
  %v355 = vpack.c.b16 %v325, %v324
  %v356 = vpack.c.b16 %v327, %v326
  %v357 = vpack.c.b16 %v329, %v328
  %v358 = vpack.c.b16 %v331, %v330
  %v359 = vpack.c.b16 %v333, %v332
  %v360 = vpack.c.b16 %v335, %v334
  %v361 = vpack.c.b16 %v337, %v336
  %v362 = vpack.c.b16 %v339, %v338
  %v363 = vpack.c.b16 %v341, %v340
  %v364 = vpack.c.b16 %v343, %v342
  %v365 = vpack.c.b16 %v345, %v344
  %v366 = vpack.c.b16 %v347, %v346
  %v367 = vpack.c.b16 %v349, %v348
  %v368 = vpack.c.b16 %v351, %v350
  %v369 = vpack.c.b16 %v353, %v352
  %386 = vmatpush.bf16.msra.mxu0 %v361
  %387 = vmatpush.bf16.msra.mxu0 %v360
  %388 = vmatpush.bf16.msra.mxu0 %v359
  %389 = vmatpush.bf16.msra.mxu0 %v358
  %390 = vmatpush.bf16.msra.mxu0 %v357
  %391 = vmatpush.bf16.msra.mxu0 %v356
  %392 = vmatpush.bf16.msra.mxu0 %v355
  %393 = vmatpush.bf16.msra.mxu0 %v354
  %394 = vmatmul.bf16.gmra.mxu0 %v98
  %v395 = vpop.f32.mrf.mxu0
  %v396 = vadd.f32 %v287, %v395
  %v397 = vpop.f32.mrf.mxu0
  %398 = vdwg.mxu0
  %399 = vmatpush.bf16.msra.mxu0 %v369
  %400 = vmatpush.bf16.msra.mxu0 %v368
  %401 = vmatpush.bf16.msra.mxu0 %v367
  %402 = vmatpush.bf16.msra.mxu0 %v366
  %403 = vmatpush.bf16.msra.mxu0 %v365
  %404 = vmatpush.bf16.msra.mxu0 %v364
  %405 = vmatpush.bf16.msra.mxu0 %v363
  %406 = vmatpush.bf16.msra.mxu0 %v362
  %407 = vmatmul.bf16.gmra.mxu0 %v102
  %v408 = vpop.f32.mrf.mxu0
  %v409 = vadd.f32 %v396, %v408
  %v410 = vpop.f32.mrf.mxu0
  %411 = vdwg.mxu0
  %412 = vst [vmem:[%s3] sm:$0xff] %v409
  // Predicated region
  $region14: #{temporal_embedding.1} parent=0 // pred_check
    _
  $region15: #{temporal_embedding.1} parent=0 // pred_check_branch
    %414 = sbr.rel (0) target = $region17
  $region16: #{temporal_embedding.1} parent=0 // pred_region
    _
  $region17: #{temporal_embedding.1} parent=0 // pred_fallthru
    _
  // Predicated region
  $region18: #{temporal_embedding.1} parent=0 // pred_check
    _
  $region19: #{temporal_embedding.1} parent=0 // pred_check_branch
    %416 = sbr.rel (0) target = $region21
  $region20: #{temporal_embedding.1} parent=0 // pred_region
    _
  $region21: #{temporal_embedding.1} parent=0 // pred_fallthru
    _

</llo_original>
